<compile_context>
chip_gen: v7x
topology: tpu7x:2x2x1
jax: 0.10.0
libtpu: 0.0.40
codegen_flags: <defaults>
</compile_context>

<pallas_src>
import jax
import jax.numpy as jnp
from jax.experimental import pallas as pl
from jax.experimental.pallas import tpu as pltpu

_LANE = 1024  # lane-dense fallback last dim (large multiple of 128)


def _swish_kernel(x_ref, o_ref):
    x = x_ref[...]
    # Compute in f32 (stable sigmoid; also required on v5e, which has no bf16
    # VPU/EUP), then cast back. Free at the HBM-bandwidth roofline.
    xf = x.astype(jnp.float32)
    o_ref[...] = (xf * jax.nn.sigmoid(xf)).astype(o_ref.dtype)


def _target_block_bytes():
    """~2 MiB blocks by default (v5e-safe), ~4 MiB on v6e/v7x."""
    try:
        kind = jax.devices()[0].device_kind.lower()
    except Exception:
        kind = ""
    if "v6" in kind or "v7" in kind:
        return 4 << 20
    return 2 << 20


def _pick_row_tile(rows, lane, dtype, target_bytes):
    """Row tile: ~target_bytes per block, multiple of the sublane-packing
    granule, and >= 2 balanced grid steps whenever rows allow it (megacore)."""
    itemsize = jnp.dtype(dtype).itemsize
    sub = max(8, 32 // itemsize)  # 8 for f32, 16 for bf16, 32 for int8/fp8
    tile = target_bytes // (lane * itemsize)
    tile = max(sub, (tile // sub) * sub)
    if rows <= sub:
        # Single full-extent block; (8,128) rule exempt when block == array dim.
        return rows
    # Split into at least two roughly balanced steps so v7x uses both TCs.
    half = -(-rows // 2)            # cdiv(rows, 2)
    half = -(-half // sub) * sub    # round up to sublane multiple
    return min(tile, half)


def swish(x, *, donate_input=False):
    """Swish activation: x * sigmoid(x)."""
    orig_shape = x.shape
    n = x.size
    if n == 0:
        return x

    dtype = x.dtype
    itemsize = jnp.dtype(dtype).itemsize
    target_bytes = _target_block_bytes()

    # --- Pick a lane-dense 2D view, avoiding pad/slice whenever possible. ---
    pad = 0
    if (x.ndim >= 2 and orig_shape[-1] % 128 == 0 and orig_shape[-1] > 0
            and orig_shape[-1] * itemsize <= target_bytes):
        # Common NN case: last dim already lane-aligned. Collapsing leading
        # dims is a free reshape.
        lane = orig_shape[-1]
        rows = n // lane
        x2d = x.reshape(rows, lane)
    elif n % _LANE == 0:
        # Total size lane-aligned: single reshape, no pad, no slice.
        lane = _LANE
        rows = n // lane
        x2d = x.reshape(rows, lane)
    else:
        # Ragged: pad only the element remainder up to one lane row.
        # swish(0) == 0, so zero padding is harmless; sliced off below.
        lane = _LANE
        rows = pl.cdiv(n, lane)
        pad = rows * lane - n
        x2d = jnp.pad(x.reshape(-1), (0, pad)).reshape(rows, lane)

    tile_r = _pick_row_tile(rows, lane, dtype, target_bytes)
    grid_steps = pl.cdiv(rows, tile_r)

    cp_kwargs = dict(dimension_semantics=("parallel",))
    if target_bytes > (2 << 20):
        # 4 MiB blocks: in+out double-buffered = 16 MiB; make the scoped VMEM
        # limit explicit so we never trip a smaller default.
        cp_kwargs["vmem_limit_bytes"] = 32 << 20

    call_kwargs = {}
    if donate_input:
        call_kwargs["input_output_aliases"] = {0: 0}

    out = pl.pallas_call(
        _swish_kernel,
        out_shape=jax.ShapeDtypeStruct((rows, lane), dtype),
        grid=(grid_steps,),
        in_specs=[pl.BlockSpec((tile_r, lane), lambda i: (i, 0))],
        out_specs=pl.BlockSpec((tile_r, lane), lambda i: (i, 0)),
        compiler_params=pltpu.CompilerParams(**cp_kwargs),
        **call_kwargs,
    )(x2d)

    if pad:
        return out.reshape(-1)[:n].reshape(orig_shape)
    return out.reshape(orig_shape)


if __name__ == "__main__":
    key = jax.random.PRNGKey(0)
    # NCHW-style input, matching how PyTorch conv/activation tensors look.
    x = jax.random.normal(key, (2, 4, 16, 16), dtype=jnp.float32)

    y = jax.block_until_ready(swish(x))

    # Reference check in plain JAX.
    y_ref = x * jax.nn.sigmoid(x)
    assert y.shape == x.shape and y.dtype == x.dtype
    assert jnp.max(jnp.abs(y - y_ref)) < 1e-5

    # Also exercise a ragged size (hits the pad path) and a lane-aligned
    # last-dim size (hits the zero-copy collapse path).
    x2 = jax.random.normal(jax.random.PRNGKey(1), (3, 5, 7), dtype=jnp.float32)
    y2 = jax.block_until_ready(swish(x2))
    assert jnp.max(jnp.abs(y2 - x2 * jax.nn.sigmoid(x2))) < 1e-5

    x3 = jax.random.normal(jax.random.PRNGKey(2), (2, 8, 256), dtype=jnp.bfloat16)
    y3 = jax.block_until_ready(swish(x3))
    ref3 = (x3.astype(jnp.float32) * jax.nn.sigmoid(x3.astype(jnp.float32))
            ).astype(jnp.bfloat16)
    assert jnp.max(jnp.abs(y3.astype(jnp.float32) - ref3.astype(jnp.float32))) < 2e-2

    print("KERNEL_OK")
</pallas_src>

<mosaic_0001>
module attributes {stable_mosaic.version = 11 : i64} {
  func.func @_swish_kernel(%arg0: i32, %arg1: memref<2x1024xf32, #tpu.memory_space<vmem>>, %arg2: memref<2x1024xf32, #tpu.memory_space<vmem>>) attributes {dimension_semantics = [#tpu.dimension_semantics<parallel>], iteration_bounds = array<i64: 1>, scalar_prefetch = 0 : i64, scratch_operands = 0 : i64, tpu.core_type = #tpu.core_type<tc>, window_params = [{transform_indices = @transform_0, window_bounds = array<i64: 2, 1024>}, {transform_indices = @transform_1, window_bounds = array<i64: 2, 1024>}]} {
    %c0 = arith.constant 0 : index
    %c0_0 = arith.constant 0 : index
    %0 = vector.load %arg1[%c0, %c0_0] : memref<2x1024xf32, #tpu.memory_space<vmem>>, vector<2x1024xf32>
    %1 = arith.negf %0 : vector<2x1024xf32>
    %2 = math.exp %1 : vector<2x1024xf32>
    %cst = arith.constant 1.000000e+00 : f32
    %3 = vector.broadcast %cst : f32 to vector<2x1024xf32>
    %4 = arith.addf %3, %2 : vector<2x1024xf32>
    %5 = arith.divf %3, %4 : vector<2x1024xf32>
    %6 = arith.mulf %0, %5 : vector<2x1024xf32>
    %c0_1 = arith.constant 0 : index
    %c0_2 = arith.constant 0 : index
    %7 = vector.load %arg2[%c0_1, %c0_2] : memref<2x1024xf32, #tpu.memory_space<vmem>>, vector<2x1024xf32>
    tpu.vector_store %arg2[%c0_1, %c0_2], %6 {strides = array<i32>} : memref<2x1024xf32, #tpu.memory_space<vmem>>, vector<2x1024xf32>,
    return
  }
  func.func @transform_0(%arg0: i32) -> (i32, i32) {
    %c0_i32 = arith.constant 0 : i32
    %c0_i32_0 = arith.constant 0 : i32
    return %arg0, %c0_i32 : i32, i32
  }
  func.func @transform_1(%arg0: i32) -> (i32, i32) {
    %c0_i32 = arith.constant 0 : i32
    %c0_i32_0 = arith.constant 0 : i32
    return %arg0, %c0_i32 : i32, i32
  }
}

</mosaic_0001>

<llo_original>
// kernel: tpu_custom_call.1
$region0: #{tpu_custom_call.1}
  #allocation0 [shape = 'u32[]', space=smem, size = 0x4, offset = 0x4, fixed_abs, tag = 'smem constant byte address 0x4 - core index']
  #allocation1 [shape = 'u32[144,128]{1,0:T(1,128)}', space=vmem, size = 0x12000, scoped, tag = 'internal scratch']
  %s0 = inlined_call_operand.hbm [shape: f32[2,1024], index: 0, kind: input, shape index: {}]
  %s1 = inlined_call_operand.hbm [shape: f32[2,1024], index: 1, kind: output, shape index: {}]
  %s2 = sld [smem:[#allocation0]]
  $region18: #{tpu_custom_call.1} parent=0
    _
  %s4 = ssub.s32 1, %s2
  %s5 = scalar_select 0, %s4, %s2
  $region1: #{tpu_custom_call.1} parent=0
    #allocation2 [shape = 'u8[8192]{0}', space=vmem, size = 0x2000, scoped, tag = 'input window, operand 0, single buffered']
    #allocation3 [shape = 's32[1]{0}', space=sflag, size = 0x4, scoped, tag = 'scoped memory for tpu_custom_call.1']
    #allocation4 [shape = 's32[1]{0}', space=sflag, size = 0x4, scoped, tag = 'scoped memory for tpu_custom_call.1']
    #allocation5 [shape = 'u8[8192]{0}', space=vmem, size = 0x2000, scoped, tag = 'output window, operand 0, single buffered']
    %6 = vsyncpa [#allocation3], 0
    %7 = vsyncpa [#allocation4], 0
    // Predicated region
    $region2: #{tpu_custom_call.1} parent=1 // pred_check
      _
    $region3: #{tpu_custom_call.1} parent=1 // pred_check_branch
      %9 = sbr.rel (0) target = $region5
    $region4: #{tpu_custom_call.1} parent=1 // pred_region
      %s11 = ssub.s32 256, 256
      %12 = vsyncadd [#allocation3], %s11
      %s14 = sshll.u32 [#allocation2], 4
      %s15 = int_to_ptr.vmem [resolvable:$true] %s14
      %17 = dma.hbm_to_vmem [thread:$0]  %s0, 256, %s15, [#allocation3]
    $region5: #{tpu_custom_call.1} parent=1 // pred_fallthru
      _
    // Predicated region
    $region6: #{tpu_custom_call.1} parent=1 // pred_check
      _
    $region7: #{tpu_custom_call.1} parent=1 // pred_check_branch
      %19 = sbr.rel (0) target = $region9
    $region8: #{tpu_custom_call.1} parent=1 // pred_region
      %20 = dma.done [#allocation3], 256
    $region9: #{tpu_custom_call.1} parent=1 // pred_fallthru
      _
    %v21 = vld [vmem:[#allocation2] sm:$0xff]
    %v22 = vld [vmem:[#allocation2 + $0x8] sm:$0xff]
    %v23 = vxor.u32 %v21, 2147483648
    %v24 = vxor.u32 %v22, 2147483648
    %v25 = vmul.f32 %v23, 1.442695
    %v26 = vpow.pop %v25
    %v27 = vmul.f32 %v24, 1.442695
    %v28 = vpow.pop %v27
    %v29 = vadd.f32 %v26, 1.0
    %v30 = vadd.f32 %v28, 1.0
    %v31 = vrcp.pop %v29
    %v32 = vmul.f32 1.0, %v31
    %v33 = vrcp.pop %v30
    %v34 = vmul.f32 1.0, %v33
    %v35 = vmul.f32 %v21, %v32
    %v36 = vmul.f32 %v22, %v34
    %37 = vst [vmem:[#allocation5] sm:$0xff] %v35
    %38 = vst [vmem:[#allocation5 + $0x8] sm:$0xff] %v36
    // Predicated region
    $region10: #{tpu_custom_call.1} parent=1 // pred_check
      _
    $region11: #{tpu_custom_call.1} parent=1 // pred_check_branch
      %40 = sbr.rel (0) target = $region13
    $region12: #{tpu_custom_call.1} parent=1 // pred_region
      %s42 = ssub.s32 256, 256
      %43 = vsyncadd [#allocation4], %s42
      %s45 = sshll.u32 [#allocation5], 4
      %s46 = int_to_ptr.vmem [resolvable:$true] %s45
      %48 = dma.vmem_to_hbm [thread:$0]  %s46, 256, %s1, [#allocation4]
    $region13: #{tpu_custom_call.1} parent=1 // pred_fallthru
      _
    // Predicated region
    $region14: #{tpu_custom_call.1} parent=1 // pred_check
      _
    $region15: #{tpu_custom_call.1} parent=1 // pred_check_branch
      %50 = sbr.rel (0) target = $region17
    $region16: #{tpu_custom_call.1} parent=1 // pred_region
      %51 = dma.done [#allocation4], 256
    $region17: #{tpu_custom_call.1} parent=1 // pred_fallthru
      _
    %52 = vsyncpa [#allocation3], 1
    %53 = vsyncpa [#allocation4], 1

</llo_original>
